<compile_context>
chip_gen: v7x
topology: tpu7x:2x2x1
jax: 0.10.0
libtpu: 0.0.40
codegen_flags: <defaults>
</compile_context>

<pallas_src>
import functools

import jax
import jax.numpy as jnp
from jax.experimental import pallas as pl
from jax.experimental.pallas import tpu as pltpu


def _pixelnorm_kernel(x_ref, o_ref, *, inv_c, eps):
    # x_ref / o_ref: (BN, C, TILE_ROWS, 128) or (BN, C, TILE_HW) in VMEM.
    # Channel axis is always axis=1; 1/C is folded into the rsqrt argument.
    xf = x_ref[...].astype(jnp.float32)
    ss = jnp.sum(xf * xf, axis=1, keepdims=True)       # sum of squares over C
    scale = jax.lax.rsqrt(ss * inv_c + eps)            # EUP rsqrt
    o_ref[...] = (xf * scale).astype(o_ref.dtype)


def _vmem_budgets():
    """Return (max f32-equivalent tile bytes, explicit scoped-VMEM limit)."""
    cap = None
    try:
        info = pltpu.get_tpu_info()
        for name in ("vmem_capacity_bytes", "vmem_size_bytes", "vmem_bytes"):
            v = getattr(info, name, None)
            if v is None:
                continue
            try:
                v = int(v)
            except (TypeError, ValueError):
                continue
            if v > 0:
                cap = v
                break
    except Exception:
        cap = None

    mib = 1024 * 1024
    if cap is None:
        # Unknown generation: conservative, safe everywhere.
        return 4 * mib, 48 * mib
    if cap <= 64 * mib:
        # v7x: 64 MiB physical VMEM per TensorCore, 3.2 TB/s HBM -> bigger
        # tiles to amortize the ~0.35 us/step cost, 48 MiB scoped limit.
        return 6 * mib, 48 * mib
    # v5e / v6e: 128 MiB physical VMEM.
    return 4 * mib, 64 * mib


def pixelnorm_nchw(x, eps=1e-8):
    """x: (N, C, H, W) — matches NormalizationLayer.forward."""
    n, c, h, w = x.shape
    hw = h * w
    itemsize = jnp.dtype(x.dtype).itemsize

    tile_budget, vmem_limit = _vmem_budgets()
    kernel = functools.partial(_pixelnorm_kernel, inv_c=1.0 / c, eps=float(eps))

    cost = pl.CostEstimate(
        flops=3 * n * c * hw,                 # square, reduce-add, scale
        transcendentals=n * hw,               # one rsqrt per pixel
        bytes_accessed=2 * n * c * hw * itemsize,
    )
    cparams = pltpu.CompilerParams(
        dimension_semantics=("parallel",),    # one long axis -> balanced megacore
        vmem_limit_bytes=vmem_limit,
    )

    # f32-equivalent footprint of one image's (C, H*W) slab (covers the
    # in-kernel f32 temporaries even when the input is bf16).
    per_image_f32 = c * hw * 4

    if hw % 128 == 0:
        # --- Preferred path: H*W on both sublanes and lanes -----------------
        rows = hw // 128
        x4 = x.reshape(n, c, rows, 128)

        if per_image_f32 <= tile_budget:
            # Tiny feature maps: pack several batch images into one block so
            # each DMA reaches the budget instead of being step-overhead bound.
            bn = int(min(n, max(1, tile_budget // per_image_f32)))
            grid = ((n + bn - 1) // bn,)
            block = (bn, c, rows, 128)
            imap = lambda g: (g, 0, 0, 0)
        else:
            # Tile the sublane (row) axis in multiples of 8.
            tile_rows = (tile_budget // (c * 128 * 4)) // 8 * 8
            tile_rows = int(max(8, tile_rows))
            if tile_rows >= rows:
                tile_rows = rows
            nr = (rows + tile_rows - 1) // tile_rows
            grid = (n * nr,)
            block = (1, c, tile_rows, 128)
            imap = lambda g: (g // nr, 0, g % nr, 0)

        y = pl.pallas_call(
            kernel,
            out_shape=jax.ShapeDtypeStruct(x4.shape, x.dtype),
            grid_spec=pltpu.PrefetchScalarGridSpec(
                num_scalar_prefetch=0,
                grid=grid,
                in_specs=[pl.BlockSpec(block, imap)],
                out_specs=pl.BlockSpec(block, imap),
            ),
            compiler_params=cparams,
            cost_estimate=cost,
        )(x4)
        return y.reshape(n, c, h, w)

    # --- Fallback path: (N, C, H*W), channel on sublanes --------------------
    x3 = x.reshape(n, c, hw)

    if per_image_f32 <= tile_budget:
        # Full (C, H*W) extent per image (legal block even if hw % 128 != 0,
        # no masked remainder tile); batch images to reach the byte budget.
        bn = int(min(n, max(1, tile_budget // per_image_f32)))
        grid = ((n + bn - 1) // bn,)
        block = (bn, c, hw)
        imap = lambda g: (g, 0, 0)
    else:
        tile_hw = (tile_budget // (c * 4)) // 128 * 128
        tile_hw = int(max(128, tile_hw))
        if tile_hw >= hw:
            tile_hw = hw
        nt = (hw + tile_hw - 1) // tile_hw
        grid = (n * nt,)
        block = (1, c, tile_hw)
        imap = lambda g: (g // nt, 0, g % nt)

    y = pl.pallas_call(
        kernel,
        out_shape=jax.ShapeDtypeStruct(x3.shape, x.dtype),
        grid_spec=pltpu.PrefetchScalarGridSpec(
            num_scalar_prefetch=0,
            grid=grid,
            in_specs=[pl.BlockSpec(block, imap)],
            out_specs=pl.BlockSpec(block, imap),
        ),
        compiler_params=cparams,
        cost_estimate=cost,
    )(x3)
    return y.reshape(n, c, h, w)


def normalization_layer(x_nchw, eps=1e-8):
    """Matches NormalizationLayer.forward on NCHW input."""
    return pixelnorm_nchw(x_nchw, eps=eps)


def _reference(x, eps=1e-8):
    # Plain JAX mirror of the PyTorch forward.
    return x * jax.lax.rsqrt(jnp.mean(x * x, axis=1, keepdims=True) + eps)


if __name__ == "__main__":
    key = jax.random.PRNGKey(0)

    # Primary test: small C, 128-aligned H*W -> exercises the 4D fast path.
    x = jax.random.normal(key, (2, 4, 16, 16), dtype=jnp.float32)
    y = jax.block_until_ready(normalization_layer(x))
    ref = _reference(x)
    assert y.shape == x.shape and y.dtype == x.dtype
    assert jnp.allclose(y, ref, atol=1e-5, rtol=1e-5)

    # Secondary test: non-128-multiple H*W -> exercises the 3D fallback path.
    x2 = jax.random.normal(jax.random.PRNGKey(1), (2, 4, 5, 5), dtype=jnp.float32)
    y2 = jax.block_until_ready(normalization_layer(x2))
    ref2 = _reference(x2)
    assert y2.shape == x2.shape and y2.dtype == x2.dtype
    assert jnp.allclose(y2, ref2, atol=1e-5, rtol=1e-5)

    print("KERNEL_OK")
</pallas_src>

<mosaic_0001>
module attributes {stable_mosaic.version = 11 : i64} {
  func.func @_pixelnorm_kernel(%arg0: i32, %arg1: memref<2x4x2x128xf32, #tpu.memory_space<vmem>>, %arg2: memref<2x4x2x128xf32, #tpu.memory_space<vmem>>) attributes {dimension_semantics = [#tpu.dimension_semantics<parallel>], iteration_bounds = array<i64: 1>, scalar_prefetch = 0 : i64, scratch_operands = 0 : i64, tpu.core_type = #tpu.core_type<tc>, window_params = [{transform_indices = @transform_0, window_bounds = array<i64: 2, 4, 2, 128>}, {transform_indices = @transform_1, window_bounds = array<i64: 2, 4, 2, 128>}]} {
    %c0 = arith.constant 0 : index
    %c0_0 = arith.constant 0 : index
    %c0_1 = arith.constant 0 : index
    %c0_2 = arith.constant 0 : index
    %0 = vector.load %arg1[%c0, %c0_0, %c0_1, %c0_2] : memref<2x4x2x128xf32, #tpu.memory_space<vmem>>, vector<2x4x2x128xf32>
    %1 = arith.mulf %0, %0 : vector<2x4x2x128xf32>
    %cst = arith.constant dense<0.000000e+00> : vector<2x2x128xf32>
    %2 = vector.multi_reduction <add>, %1, %cst [1] : vector<2x4x2x128xf32> to vector<2x2x128xf32>
    %3 = vector.shape_cast %2 : vector<2x2x128xf32> to vector<2x1x2x128xf32>
    %cst_3 = arith.constant 2.500000e-01 : f32
    %4 = vector.broadcast %cst_3 : f32 to vector<2x1x2x128xf32>
    %5 = arith.mulf %3, %4 : vector<2x1x2x128xf32>
    %cst_4 = arith.constant 9.99999993E-9 : f32
    %6 = vector.broadcast %cst_4 : f32 to vector<2x1x2x128xf32>
    %7 = arith.addf %5, %6 : vector<2x1x2x128xf32>
    %8 = math.rsqrt %7 : vector<2x1x2x128xf32>
    %9 = vector.broadcast %8 : vector<2x1x2x128xf32> to vector<2x4x2x128xf32>
    %10 = arith.mulf %0, %9 : vector<2x4x2x128xf32>
    %c0_5 = arith.constant 0 : index
    %c0_6 = arith.constant 0 : index
    %c0_7 = arith.constant 0 : index
    %c0_8 = arith.constant 0 : index
    %11 = vector.load %arg2[%c0_5, %c0_6, %c0_7, %c0_8] : memref<2x4x2x128xf32, #tpu.memory_space<vmem>>, vector<2x4x2x128xf32>
    tpu.vector_store %arg2[%c0_5, %c0_6, %c0_7, %c0_8], %10 {strides = array<i32>} : memref<2x4x2x128xf32, #tpu.memory_space<vmem>>, vector<2x4x2x128xf32>,
    return
  }
  func.func @transform_0(%arg0: i32) -> (i32, i32, i32, i32) {
    %c0_i32 = arith.constant 0 : i32
    %c0_i32_0 = arith.constant 0 : i32
    %c0_i32_1 = arith.constant 0 : i32
    %c0_i32_2 = arith.constant 0 : i32
    return %arg0, %c0_i32, %c0_i32_0, %c0_i32_1 : i32, i32, i32, i32
  }
  func.func @transform_1(%arg0: i32) -> (i32, i32, i32, i32) {
    %c0_i32 = arith.constant 0 : i32
    %c0_i32_0 = arith.constant 0 : i32
    %c0_i32_1 = arith.constant 0 : i32
    %c0_i32_2 = arith.constant 0 : i32
    return %arg0, %c0_i32, %c0_i32_0, %c0_i32_1 : i32, i32, i32, i32
  }
}

</mosaic_0001>

<llo_original>
// kernel: tpu_custom_call.1
$region0: #{tpu_custom_call.1}
  #allocation0 [shape = 'u32[]', space=smem, size = 0x4, offset = 0x4, fixed_abs, tag = 'smem constant byte address 0x4 - core index']
  #allocation1 [shape = 'u32[144,128]{1,0:T(1,128)}', space=vmem, size = 0x12000, scoped, tag = 'internal scratch']
  %s0 = inlined_call_operand.hbm [shape: f32[2,4,2,128], index: 0, kind: input, shape index: {}]
  %s1 = inlined_call_operand.hbm [shape: f32[2,4,2,128], index: 1, kind: output, shape index: {}]
  %s2 = sld [smem:[#allocation0]]
  $region18: #{tpu_custom_call.1} parent=0
    _
  %s4 = ssub.s32 1, %s2
  %s5 = scalar_select 0, %s4, %s2
  $region1: #{tpu_custom_call.1} parent=0
    #allocation2 [shape = 'u8[8192]{0}', space=vmem, size = 0x2000, scoped, tag = 'input window, operand 0, single buffered']
    #allocation3 [shape = 's32[1]{0}', space=sflag, size = 0x4, scoped, tag = 'scoped memory for tpu_custom_call.1']
    #allocation4 [shape = 's32[1]{0}', space=sflag, size = 0x4, scoped, tag = 'scoped memory for tpu_custom_call.1']
    #allocation5 [shape = 'u8[8192]{0}', space=vmem, size = 0x2000, scoped, tag = 'output window, operand 0, single buffered']
    %6 = vsyncpa [#allocation3], 0
    %7 = vsyncpa [#allocation4], 0
    // Predicated region
    $region2: #{tpu_custom_call.1} parent=1 // pred_check
      _
    $region3: #{tpu_custom_call.1} parent=1 // pred_check_branch
      %9 = sbr.rel (0) target = $region5
    $region4: #{tpu_custom_call.1} parent=1 // pred_region
      %s11 = ssub.s32 256, 256
      %12 = vsyncadd [#allocation3], %s11
      %s13 = sshll.u32 [#allocation2], 4
      %s14 = int_to_ptr.vmem [resolvable:$true] %s13
      %19 = dma.hbm_to_vmem [thread:$0]  %s0, 256, %s14, [#allocation3], 32, 32, 2
    $region5: #{tpu_custom_call.1} parent=1 // pred_fallthru
      _
    // Predicated region
    $region6: #{tpu_custom_call.1} parent=1 // pred_check
      _
    $region7: #{tpu_custom_call.1} parent=1 // pred_check_branch
      %21 = sbr.rel (0) target = $region9
    $region8: #{tpu_custom_call.1} parent=1 // pred_region
      %22 = dma.done [#allocation3], 256
    $region9: #{tpu_custom_call.1} parent=1 // pred_fallthru
      _
    %v23 = vld [vmem:[#allocation2] sm:$0x3]
    %v24 = vld [vmem:[#allocation2 + $0x2] sm:$0x3]
    %v25 = vld [vmem:[#allocation2 + $0x4] sm:$0x3]
    %v26 = vld [vmem:[#allocation2 + $0x6] sm:$0x3]
    %v27 = vld [vmem:[#allocation2 + $0x8] sm:$0x3]
    %v28 = vld [vmem:[#allocation2 + $0xa] sm:$0x3]
    %v29 = vld [vmem:[#allocation2 + $0xc] sm:$0x3]
    %v30 = vld [vmem:[#allocation2 + $0xe] sm:$0x3]
    %v31 = vmul.f32 %v23, %v23
    %v32 = vmul.f32 %v24, %v24
    %v33 = vmul.f32 %v25, %v25
    %v34 = vmul.f32 %v26, %v26
    %v35 = vmul.f32 %v27, %v27
    %v36 = vmul.f32 %v28, %v28
    %v37 = vmul.f32 %v29, %v29
    %v38 = vmul.f32 %v30, %v30
    %vm39 = vcmask 1041408
    %v40 = vsel %vm39, %v31, 0.0
    %v41 = vsel %vm39, %v32, 0.0
    %v42 = vadd.f32 %v40, %v41
    %v43 = vsel %vm39, %v33, 0.0
    %v44 = vadd.f32 %v42, %v43
    %v45 = vsel %vm39, %v34, 0.0
    %v46 = vadd.f32 %v44, %v45
    %v47 = vsel %vm39, %v35, 0.0
    %v48 = vsel %vm39, %v36, 0.0
    %v49 = vadd.f32 %v47, %v48
    %v50 = vsel %vm39, %v37, 0.0
    %v51 = vadd.f32 %v49, %v50
    %v52 = vsel %vm39, %v38, 0.0
    %v53 = vadd.f32 %v51, %v52
    %v54 = vmul.f32 %v46, 0.25
    %v55 = vmul.f32 %v53, 0.25
    %v56 = vadd.f32 %v54, 1e-08
    %v57 = vadd.f32 %v55, 1e-08
    %v58 = vrsqrt.pop %v56
    %v59 = vrsqrt.pop %v57
    %v60 = vmul.f32 %v23, %v58
    %v61 = vmul.f32 %v24, %v58
    %v62 = vmul.f32 %v25, %v58
    %v63 = vmul.f32 %v26, %v58
    %v64 = vmul.f32 %v27, %v59
    %v65 = vmul.f32 %v28, %v59
    %v66 = vmul.f32 %v29, %v59
    %v67 = vmul.f32 %v30, %v59
    %68 = vst [vmem:[#allocation5] sm:$0x3] %v60
    %69 = vst [vmem:[#allocation5 + $0x2] sm:$0x3] %v61
    %70 = vst [vmem:[#allocation5 + $0x4] sm:$0x3] %v62
    %71 = vst [vmem:[#allocation5 + $0x6] sm:$0x3] %v63
    %72 = vst [vmem:[#allocation5 + $0x8] sm:$0x3] %v64
    %73 = vst [vmem:[#allocation5 + $0xa] sm:$0x3] %v65
    %74 = vst [vmem:[#allocation5 + $0xc] sm:$0x3] %v66
    %75 = vst [vmem:[#allocation5 + $0xe] sm:$0x3] %v67
    // Predicated region
    $region10: #{tpu_custom_call.1} parent=1 // pred_check
      _
    $region11: #{tpu_custom_call.1} parent=1 // pred_check_branch
      %77 = sbr.rel (0) target = $region13
    $region12: #{tpu_custom_call.1} parent=1 // pred_region
      %s79 = ssub.s32 256, 256
      %80 = vsyncadd [#allocation4], %s79
      %s81 = sshll.u32 [#allocation5], 4
      %s82 = int_to_ptr.vmem [resolvable:$true] %s81
      %87 = dma.vmem_to_hbm [thread:$0]  %s82, 256, %s1, [#allocation4], 32, 32, 2
    $region13: #{tpu_custom_call.1} parent=1 // pred_fallthru
      _
    // Predicated region
    $region14: #{tpu_custom_call.1} parent=1 // pred_check
      _
    $region15: #{tpu_custom_call.1} parent=1 // pred_check_branch
      %89 = sbr.rel (0) target = $region17
    $region16: #{tpu_custom_call.1} parent=1 // pred_region
      %90 = dma.done [#allocation4], 256
    $region17: #{tpu_custom_call.1} parent=1 // pred_fallthru
      _
    %91 = vsyncpa [#allocation3], 1
    %92 = vsyncpa [#allocation4], 1

</llo_original>
